<compile_context>
chip_gen: v7x
topology: tpu7x:2x2x1
jax: 0.10.0
libtpu: 0.0.40
codegen_flags: <defaults>
</compile_context>

<pallas_src>
import math
import functools

import jax
import jax.numpy as jnp
from jax.experimental import pallas as pl
from jax.experimental.pallas import tpu as pltpu


# ---------------------------------------------------------------------------
# Generation-keyed config (VMEM limit + linear tile targets)
# ---------------------------------------------------------------------------
@functools.lru_cache(maxsize=1)
def _hw_config():
    cap = None
    try:
        cap = pltpu.get_tpu_info().vmem_capacity_bytes
    except Exception:
        cap = None
    if cap is not None and cap >= 96 * 1024 * 1024:
        # v5e / v6e: 128 MiB physical VMEM -> use it (bigger tiles, fewer steps).
        return {"vmem_limit": 96 * 1024 * 1024, "tm": 512, "tn": 512, "tk": 1024}
    # v7x (64 MiB physical) or unknown: conservative.
    return {"vmem_limit": 48 * 1024 * 1024, "tm": 256, "tn": 256, "tk": 512}


def _pick_tile(dim, target, base):
    """Largest tile <= target that divides `dim` and is a multiple of `base`.
    Falls back to the full dimension (always a legal block shape)."""
    if dim <= target:
        return dim
    t = (target // base) * base
    while t >= base:
        if dim % t == 0:
            return t
        t -= base
    return dim


# ---------------------------------------------------------------------------
# Tiled linear:  y = x @ W_kn + b   (W_kn is the pre-transposed (K, N) weight)
# ---------------------------------------------------------------------------
def _linear_kernel(x_ref, w_ref, b_ref, o_ref, acc_ref):
    k_idx = pl.program_id(2)

    @pl.when(k_idx == 0)
    def _init():
        acc_ref[...] = jnp.zeros_like(acc_ref)

    # Canonical [tm,tk] x [tk,tn] MXU matmul, f32 accumulation.
    acc_ref[...] += jnp.dot(x_ref[...], w_ref[...],
                            preferred_element_type=jnp.float32)

    @pl.when(k_idx == pl.num_programs(2) - 1)
    def _finalize():
        o_ref[...] = (acc_ref[...]
                      + b_ref[...].astype(jnp.float32)).astype(o_ref.dtype)


def pallas_linear(x2d, w_kn, bias_f32, *, tm_target=None, tn_target=None,
                  tk_target=None):
    hw = _hw_config()
    tm_target = hw["tm"] if tm_target is None else tm_target
    tn_target = hw["tn"] if tn_target is None else tn_target
    tk_target = hw["tk"] if tk_target is None else tk_target

    M, K = x2d.shape
    K2, N = w_kn.shape
    assert K == K2
    tm = _pick_tile(M, tm_target, 8)
    tn = _pick_tile(N, tn_target, 128)
    tk = _pick_tile(K, tk_target, 128)
    grid = (M // tm, N // tn, K // tk)
    b2 = bias_f32.reshape(1, N)

    itemsize = x2d.dtype.itemsize
    cost = pl.CostEstimate(
        flops=2 * M * N * K,
        transcendentals=0,
        bytes_accessed=(M * K + N * K + M * N + N) * itemsize)

    return pl.pallas_call(
        _linear_kernel,
        out_shape=jax.ShapeDtypeStruct((M, N), x2d.dtype),
        grid=grid,
        in_specs=[
            pl.BlockSpec((tm, tk), lambda i, j, k: (i, k)),
            pl.BlockSpec((tk, tn), lambda i, j, k: (k, j)),
            pl.BlockSpec((1, tn), lambda i, j, k: (0, j)),
        ],
        out_specs=pl.BlockSpec((tm, tn), lambda i, j, k: (i, j)),
        scratch_shapes=[pltpu.VMEM((tm, tn), jnp.float32)],
        compiler_params=pltpu.CompilerParams(
            dimension_semantics=("parallel", "parallel", "arbitrary"),
            vmem_limit_bytes=hw["vmem_limit"]),
        cost_estimate=cost,
    )(x2d, w_kn, b2)


# ---------------------------------------------------------------------------
# Flash attention over the fused qkv tensor, all heads per block (lane-dense)
# ---------------------------------------------------------------------------
def _flash_attn_kernel(q_ref, k_ref, v_ref, o_ref, m_ref, l_ref, acc_ref, *,
                       n_heads, d_head, scale, causal, block_q, block_kv):
    qi = pl.program_id(1)
    ki = pl.program_id(2)

    @pl.when(ki == 0)
    def _init():
        m_ref[...] = jnp.full_like(m_ref, -jnp.inf)
        l_ref[...] = jnp.zeros_like(l_ref)
        acc_ref[...] = jnp.zeros_like(acc_ref)

    q_start = qi * block_q
    kv_start = ki * block_kv

    def _compute():
        # Fold 1/sqrt(d_head) into q once per tile (block_q*D mults, not
        # block_q*block_kv*n_heads on the softmax path).
        q = q_ref[0] * scale          # (block_q, D)   all heads, lane-dense
        k = k_ref[0]                  # (block_kv, D)
        v = v_ref[0]                  # (block_kv, D)

        if causal:
            # Mask built once per tile (hoisted out of the head loop).
            row = q_start + jax.lax.broadcasted_iota(
                jnp.int32, (block_q, block_kv), 0)
            col = kv_start + jax.lax.broadcasted_iota(
                jnp.int32, (block_q, block_kv), 1)
            keep = col <= row

        # TODO(synk): for n_heads >= 8 switch this static unroll to a
        # lax.fori_loop over heads (pl.ds lane slices) to bound vreg live ranges.
        for h in range(n_heads):                    # static unroll over heads
            sl = slice(h * d_head, (h + 1) * d_head)
            qh, kh, vh = q[:, sl], k[:, sl], v[:, sl]

            # (block_q, block_kv): contract on d_head; no explicit K transpose.
            s = jax.lax.dot_general(
                qh, kh, (((1,), (1,)), ((), ())),
                preferred_element_type=jnp.float32)
            if causal:
                s = jnp.where(keep, s, -jnp.inf)

            m_prev = m_ref[h]                       # (block_q, 1)
            l_prev = l_ref[h]
            m_new = jnp.maximum(m_prev, jnp.max(s, axis=-1, keepdims=True))
            alpha = jnp.exp(m_prev - m_new)
            p = jnp.exp(s - m_new)
            l_ref[h] = alpha * l_prev + jnp.sum(p, axis=-1, keepdims=True)
            m_ref[h] = m_new

            pv = jnp.dot(p.astype(vh.dtype), vh,
                         preferred_element_type=jnp.float32)
            acc_ref[:, sl] = alpha * acc_ref[:, sl] + pv

    if causal:
        # kv tiles entirely above the diagonal contribute nothing: skip them.
        # Invariant: the kv grid axis runs ki = 0..nk-1 in order, so the first
        # processed tile has kv_start == 0, which contains an unmasked column
        # for every query row -> m_ref never stays -inf (no NaN hazard).  Do
        # NOT reorder the kv grid axis without revisiting this.
        pl.when(kv_start <= q_start + (block_q - 1))(_compute)
    else:
        _compute()

    @pl.when(ki == pl.num_programs(2) - 1)
    def _finalize():
        # Normalize the accumulator in place per head, then ONE dense
        # lane-wide store (no concatenate / no extra (bq, D) temp).
        for h in range(n_heads):
            sl = slice(h * d_head, (h + 1) * d_head)
            inv_l = pl.reciprocal(l_ref[h], approx=True)   # EUP slot, ~free
            acc_ref[:, sl] = acc_ref[:, sl] * inv_l
        o_ref[0] = acc_ref[...].astype(o_ref.dtype)


def pallas_flash_attention(qkv, n_heads, causal, *, block_q=None, block_kv=None):
    """qkv: (B, S, 3*D) fused projection output -> (B, S, D) attention output."""
    hw = _hw_config()
    B, S, three_d = qkv.shape
    D = three_d // 3
    d_head = D // n_heads
    scale = 1.0 / math.sqrt(d_head)

    block_q = 256 if block_q is None else block_q
    block_kv = 512 if block_kv is None else block_kv
    bq = _pick_tile(S, block_q, 8)
    bkv = _pick_tile(S, block_kv, 8)
    # v7x megacore: keep the product of the parallel grid axes >= 2 so work is
    # sharded across both TensorCores instead of serializing on one.
    while (B * (S // bq) < 2 and bq > 8 and (bq // 2) % 8 == 0
           and S % (bq // 2) == 0):
        bq //= 2

    if D % 128 == 0:
        # Read q/k/v straight out of the fused (B, S, 3D) tensor: the BlockSpec
        # column-block offset (block width D) selects q (0), k (1) or v (2),
        # so no split / head transpose round-trips through HBM.
        q_arr = k_arr = v_arr = qkv
        q_blk, k_blk, v_blk = 0, 1, 2
    else:
        # D not lane-aligned: fall back to contiguous slices (still no transposes).
        q_arr, k_arr, v_arr = jnp.split(qkv, 3, axis=-1)
        q_blk = k_blk = v_blk = 0

    grid = (B, S // bq, S // bkv)

    q_map = lambda b, i, j: (b, i, q_blk)
    if causal:
        # Clamp the K/V block index to the diagonal tile: the above-diagonal
        # steps (whose compute is skipped via pl.when) then reuse the previous
        # block index and Pallas dedups the DMA -> ~halves causal K/V traffic.
        diag = lambda i: (i * bq + bq - 1) // bkv
        k_map = lambda b, i, j: (b, jnp.minimum(j, diag(i)), k_blk)
        v_map = lambda b, i, j: (b, jnp.minimum(j, diag(i)), v_blk)
    else:
        k_map = lambda b, i, j: (b, j, k_blk)
        v_map = lambda b, i, j: (b, j, v_blk)

    kernel = functools.partial(
        _flash_attn_kernel, n_heads=n_heads, d_head=d_head, scale=scale,
        causal=causal, block_q=bq, block_kv=bkv)

    itemsize = qkv.dtype.itemsize
    n_q_tiles = S // bq
    cost = pl.CostEstimate(
        flops=4 * B * S * S * D,
        transcendentals=B * n_heads * S * S,
        # q read + out write once, K/V streamed once per q tile.
        bytes_accessed=B * S * D * (2 + 2 * n_q_tiles) * itemsize)

    return pl.pallas_call(
        kernel,
        out_shape=jax.ShapeDtypeStruct((B, S, D), qkv.dtype),
        grid=grid,
        in_specs=[
            pl.BlockSpec((1, bq, D), q_map),
            pl.BlockSpec((1, bkv, D), k_map),
            pl.BlockSpec((1, bkv, D), v_map),
        ],
        out_specs=pl.BlockSpec((1, bq, D), lambda b, i, j: (b, i, 0)),
        scratch_shapes=[
            pltpu.VMEM((n_heads, bq, 1), jnp.float32),   # running max  m
            pltpu.VMEM((n_heads, bq, 1), jnp.float32),   # running sum  l
            pltpu.VMEM((bq, D), jnp.float32),            # output accumulator
        ],
        compiler_params=pltpu.CompilerParams(
            dimension_semantics=("parallel", "parallel", "arbitrary"),
            vmem_limit_bytes=hw["vmem_limit"]),
        cost_estimate=cost,
    )(q_arr, k_arr, v_arr)


# ---------------------------------------------------------------------------
# SelfAttention forward (all heavy lifting in Pallas, no wrapper transposes
# of activations; weight transposes are static param prep)
# ---------------------------------------------------------------------------
def self_attention_forward(x, params, n_heads, causal_mask=False, *,
                           compute_dtype=None, block_q=None, block_kv=None,
                           linear_tm=None, linear_tn=None, linear_tk=None):
    B, S, D = x.shape
    orig_dtype = x.dtype

    in_w, out_w = params["in_w"], params["out_w"]
    in_b = params["in_b"].astype(jnp.float32)     # bias math stays f32
    out_b = params["out_b"].astype(jnp.float32)

    if compute_dtype is not None:
        # Wrapper-level storage cast: all HBM<->VMEM traffic (incl. the qkv
        # round-trip between the two pallas_calls) moves in compute_dtype;
        # softmax / accumulators stay f32 inside the kernels (v5e-safe).
        x = x.astype(compute_dtype)
        in_w = in_w.astype(compute_dtype)
        out_w = out_w.astype(compute_dtype)

    # Pre-transpose PyTorch (out, in) weights to MXU-canonical (in, out).
    # In a real model these would be transposed once at parameter prep.
    in_w_t = in_w.T
    out_w_t = out_w.T

    # in_proj: (B*S, D) @ W_in^T + b_in  -> fused (B, S, 3D) qkv
    qkv = pallas_linear(x.reshape(B * S, D), in_w_t, in_b,
                        tm_target=linear_tm, tn_target=linear_tn,
                        tk_target=linear_tk)
    qkv = qkv.reshape(B, S, 3 * D)            # contiguous reshape, no transpose

    # flash attention, heads handled inside the kernel, output already (B, S, D)
    attn = pallas_flash_attention(qkv, n_heads, causal_mask,
                                  block_q=block_q, block_kv=block_kv)

    # out_proj
    out = pallas_linear(attn.reshape(B * S, D), out_w_t, out_b,
                        tm_target=linear_tm, tn_target=linear_tn,
                        tk_target=linear_tk)
    return out.reshape(B, S, D).astype(orig_dtype)


# Pure-JAX reference for correctness checking.
def self_attention_reference(x, params, n_heads, causal_mask=False):
    B, S, D = x.shape
    dh = D // n_heads
    qkv = x @ params["in_w"].T + params["in_b"]
    q, k, v = jnp.split(qkv, 3, axis=-1)
    q = q.reshape(B, S, n_heads, dh).transpose(0, 2, 1, 3)
    k = k.reshape(B, S, n_heads, dh).transpose(0, 2, 1, 3)
    v = v.reshape(B, S, n_heads, dh).transpose(0, 2, 1, 3)
    w = jnp.einsum("bhqd,bhkd->bhqk", q, k)
    if causal_mask:
        mask = jnp.triu(jnp.ones((S, S), dtype=bool), 1)
        w = jnp.where(mask, -jnp.inf, w)
    w = w / math.sqrt(dh)
    w = jax.nn.softmax(w, axis=-1)
    o = jnp.einsum("bhqk,bhkd->bhqd", w, v)
    o = o.transpose(0, 2, 1, 3).reshape(B, S, D)
    return o @ params["out_w"].T + params["out_b"]


# ---------------------------------------------------------------------------
if __name__ == "__main__":
    # Small but representative: d_head=64 (SD-like), lane-aligned D, and tile
    # sizes chosen so the flash kv loop, causal tile skipping/DMA clamping and
    # the K accumulation loop of the tiled linear are all exercised.
    B, S, D, H = 2, 16, 256, 4

    key = jax.random.PRNGKey(0)
    kx, k1, k2, k3, k4 = jax.random.split(key, 5)

    x = jax.random.normal(kx, (B, S, D), dtype=jnp.float32)

    params = {
        # nn.Linear(d_embed, 3*d_embed): weight (3D, D), bias (3D,)
        "in_w":  jax.random.normal(k1, (3 * D, D), dtype=jnp.float32) * 0.05,
        "in_b":  jax.random.normal(k2, (3 * D,),   dtype=jnp.float32) * 0.05,
        # nn.Linear(d_embed, d_embed): weight (D, D), bias (D,)
        "out_w": jax.random.normal(k3, (D, D),     dtype=jnp.float32) * 0.05,
        "out_b": jax.random.normal(k4, (D,),       dtype=jnp.float32) * 0.05,
    }

    y_ref = self_attention_reference(x, params, H, causal_mask=False)
    y_ref_c = self_attention_reference(x, params, H, causal_mask=True)

    # Small blocks: exercises the multi-tile kv loop, the causal skip/clamp and
    # the linear K-loop.
    fwd_small = functools.partial(self_attention_forward,
                                  block_q=8, block_kv=8, linear_tk=128)

    y = jax.block_until_ready(fwd_small(x, params, H, causal_mask=False))
    y_c = jax.block_until_ready(fwd_small(x, params, H, causal_mask=True))

    assert y.shape == (B, S, D)
    assert jnp.allclose(y, y_ref, atol=2e-2, rtol=2e-2), \
        float(jnp.max(jnp.abs(y - y_ref)))
    assert jnp.allclose(y_c, y_ref_c, atol=2e-2, rtol=2e-2), \
        float(jnp.max(jnp.abs(y_c - y_ref_c)))

    # Default (generation-keyed) tile config path.
    y_def = jax.block_until_ready(
        self_attention_forward(x, params, H, causal_mask=False))
    assert jnp.allclose(y_def, y_ref, atol=2e-2, rtol=2e-2), \
        float(jnp.max(jnp.abs(y_def - y_ref)))

    # Wrapper-level bf16 storage path (halves HBM traffic; MXU-native bf16 on
    # all generations). Softmax / accumulator math stays f32.
    y_bf16 = jax.block_until_ready(
        fwd_small(x, params, H, causal_mask=False, compute_dtype=jnp.bfloat16))
    y_bf16_c = jax.block_until_ready(
        fwd_small(x, params, H, causal_mask=True, compute_dtype=jnp.bfloat16))
    assert jnp.allclose(y_bf16, y_ref, atol=5e-2, rtol=5e-2), \
        float(jnp.max(jnp.abs(y_bf16 - y_ref)))
    assert jnp.allclose(y_bf16_c, y_ref_c, atol=5e-2, rtol=5e-2), \
        float(jnp.max(jnp.abs(y_bf16_c - y_ref_c)))

    print("KERNEL_OK")
</pallas_src>

<mosaic_0001>
module attributes {stable_mosaic.version = 11 : i64} {
  func.func @_linear_kernel(%arg0: i32, %arg1: i32, %arg2: i32, %arg3: memref<32x128xf32, #tpu.memory_space<vmem>>, %arg4: memref<128x256xf32, #tpu.memory_space<vmem>>, %arg5: memref<1x256xf32, #tpu.memory_space<vmem>>, %arg6: memref<32x256xf32, #tpu.memory_space<vmem>>, %arg7: memref<32x256xf32, #tpu.memory_space<vmem>>) attributes {dimension_semantics = [#tpu.dimension_semantics<parallel>, #tpu.dimension_semantics<parallel>, #tpu.dimension_semantics<arbitrary>], iteration_bounds = array<i64: 1, 3, 2>, scalar_prefetch = 0 : i64, scratch_operands = 1 : i64, tpu.core_type = #tpu.core_type<tc>, window_params = [{transform_indices = @transform_0, window_bounds = array<i64: 32, 128>}, {transform_indices = @transform_1, window_bounds = array<i64: 128, 256>}, {transform_indices = @transform_2, window_bounds = array<i64: 1, 256>}, {transform_indices = @transform_3, window_bounds = array<i64: 32, 256>}]} {
    %c0_i32 = arith.constant 0 : i32
    %0 = arith.cmpi eq, %arg2, %c0_i32 : i32
    %1 = arith.extui %0 : i1 to i32
    %c0_i32_0 = arith.constant 0 : i32
    %2 = arith.cmpi ne, %1, %c0_i32_0 : i32
    scf.if %2 {
      %cst_9 = arith.constant 0.000000e+00 : f32
      %12 = vector.broadcast %cst_9 : f32 to vector<32x256xf32>
      %c0_10 = arith.constant 0 : index
      %c0_11 = arith.constant 0 : index
      %13 = vector.load %arg7[%c0_10, %c0_11] : memref<32x256xf32, #tpu.memory_space<vmem>>, vector<32x256xf32>
      tpu.vector_store %arg7[%c0_10, %c0_11], %12 {strides = array<i32>} : memref<32x256xf32, #tpu.memory_space<vmem>>, vector<32x256xf32>,
    } else {
    }
    %c0 = arith.constant 0 : index
    %c0_1 = arith.constant 0 : index
    %3 = vector.load %arg7[%c0, %c0_1] : memref<32x256xf32, #tpu.memory_space<vmem>>, vector<32x256xf32>
    %c0_2 = arith.constant 0 : index
    %c0_3 = arith.constant 0 : index
    %4 = vector.load %arg3[%c0_2, %c0_3] : memref<32x128xf32, #tpu.memory_space<vmem>>, vector<32x128xf32>
    %c0_4 = arith.constant 0 : index
    %c0_5 = arith.constant 0 : index
    %5 = vector.load %arg4[%c0_4, %c0_5] : memref<128x256xf32, #tpu.memory_space<vmem>>, vector<128x256xf32>
    %cst = arith.constant dense<0.000000e+00> : vector<32x256xf32>
    %6 = tpu.matmul %4, %5, %cst {dimension_numbers = #tpu.dot_dimension_numbers<[1], [0], [0], [1], [0, 0, 1, 1], [], []>} : vector<32x128xf32>, vector<128x256xf32>, vector<32x256xf32> -> vector<32x256xf32>
    %7 = arith.addf %3, %6 : vector<32x256xf32>
    %c0_6 = arith.constant 0 : index
    %c0_7 = arith.constant 0 : index
    %8 = vector.load %arg7[%c0_6, %c0_7] : memref<32x256xf32, #tpu.memory_space<vmem>>, vector<32x256xf32>
    tpu.vector_store %arg7[%c0_6, %c0_7], %7 {strides = array<i32>} : memref<32x256xf32, #tpu.memory_space<vmem>>, vector<32x256xf32>,
    %c1_i32 = arith.constant 1 : i32
    %9 = arith.cmpi eq, %arg2, %c1_i32 : i32
    %10 = arith.extui %9 : i1 to i32
    %c0_i32_8 = arith.constant 0 : i32
    %11 = arith.cmpi ne, %10, %c0_i32_8 : i32
    scf.if %11 {
      %c0_9 = arith.constant 0 : index
      %c0_10 = arith.constant 0 : index
      %12 = vector.load %arg7[%c0_9, %c0_10] : memref<32x256xf32, #tpu.memory_space<vmem>>, vector<32x256xf32>
      %c0_11 = arith.constant 0 : index
      %c0_12 = arith.constant 0 : index
      %13 = vector.load %arg5[%c0_11, %c0_12] : memref<1x256xf32, #tpu.memory_space<vmem>>, vector<1x256xf32>
      %14 = vector.broadcast %13 : vector<1x256xf32> to vector<32x256xf32>
      %15 = arith.addf %12, %14 : vector<32x256xf32>
      %c0_13 = arith.constant 0 : index
      %c0_14 = arith.constant 0 : index
      %16 = vector.load %arg6[%c0_13, %c0_14] : memref<32x256xf32, #tpu.memory_space<vmem>>, vector<32x256xf32>
      tpu.vector_store %arg6[%c0_13, %c0_14], %15 {strides = array<i32>} : memref<32x256xf32, #tpu.memory_space<vmem>>, vector<32x256xf32>,
    } else {
    }
    return
  }
  func.func @transform_0(%arg0: i32, %arg1: i32, %arg2: i32) -> (i32, i32) {
    %c0_i32 = arith.constant 0 : i32
    return %arg0, %arg2 : i32, i32
  }
  func.func @transform_1(%arg0: i32, %arg1: i32, %arg2: i32) -> (i32, i32) {
    %c0_i32 = arith.constant 0 : i32
    return %arg2, %arg1 : i32, i32
  }
  func.func @transform_2(%arg0: i32, %arg1: i32, %arg2: i32) -> (i32, i32) {
    %c0_i32 = arith.constant 0 : i32
    %c0_i32_0 = arith.constant 0 : i32
    return %c0_i32, %arg1 : i32, i32
  }
  func.func @transform_3(%arg0: i32, %arg1: i32, %arg2: i32) -> (i32, i32) {
    %c0_i32 = arith.constant 0 : i32
    return %arg0, %arg1 : i32, i32
  }
}

</mosaic_0001>

<llo_original>
// kernel: tpu_custom_call.1
$region0: #{tpu_custom_call.1}
  #allocation0 [shape = 'u32[]', space=smem, size = 0x4, offset = 0x4, fixed_abs, tag = 'smem constant byte address 0x4 - core index']
  #allocation1 [shape = 'u32[144,128]{1,0:T(1,128)}', space=vmem, size = 0x12000, scoped, tag = 'internal scratch']
  #allocation2 [shape = 'f32[32,256]{1,0:T(8,128)}', space=vmem, size = 0x8000, scoped, tag = 'scratch operand']
  %s0 = inlined_call_operand.hbm [shape: f32[32,256], index: 0, kind: input, shape index: {}]
  %s1 = inlined_call_operand.hbm [shape: f32[256,768], index: 1, kind: input, shape index: {}]
  %s2 = inlined_call_operand.vmem [shape: f32[1,768], index: 2, kind: input, shape index: {}]
  %s3 = inlined_call_operand.hbm [shape: f32[32,768], index: 3, kind: output, shape index: {}]
  %s4 = sld [smem:[#allocation0]]
  $region61: #{tpu_custom_call.1} parent=0
    _
  %s6 = ssub.s32 1, %s4
  %s7 = scalar_select 0, %s6, %s4
  $region1: #{tpu_custom_call.1} parent=0
    #allocation3 [shape = 'u8[32768]{0}', space=vmem, size = 0x8000, scoped, tag = 'input window, operand 0']
    #allocation4 [shape = 's32[2]{0}', space=sflag, size = 0x8, scoped, tag = 'scoped memory for tpu_custom_call.1']
    #allocation5 [shape = 's32[2]{0}', space=sflag, size = 0x8, scoped, tag = 'scoped memory for tpu_custom_call.1']
    #allocation6 [shape = 'u8[262144]{0}', space=vmem, size = 0x40000, scoped, tag = 'input window, operand 1']
    #allocation7 [shape = 's32[2]{0}', space=sflag, size = 0x8, scoped, tag = 'scoped memory for tpu_custom_call.1']
    #allocation8 [shape = 'u8[65536]{0}', space=vmem, size = 0x10000, scoped, tag = 'output window, operand 0']
    %8 = vsyncpa [#allocation4], 0
    %s9 = scalar_lea.sflag [#allocation4], 1
    %10 = vsyncpa %s9, 0
    %11 = vsyncpa [#allocation7], 0
    %s12 = scalar_lea.sflag [#allocation7], 1
    %13 = vsyncpa %s12, 0
    %14 = vsyncpa [#allocation5], 0
    %s15 = scalar_lea.sflag [#allocation5], 1
    %16 = vsyncpa %s15, 0
    loop: start=0, step=1, limit=8
    $region2: #{tpu_custom_call.1} parent=1 // loop_pre_header
      _
    $region3: #{tpu_custom_call.1} parent=1 // loop_header
      %s18 = sphi 0, %s22
      %p19 = scmp.ge.s32.totalorder %s18, 8
      %s25 = sphi 0, %s44
      %s26 = sphi 0, %s40
      %s27 = sphi 0, %s36
      %s28 = sphi 0, %s25
      %s29 = sphi 0, %s26
      %s30 = sphi 0, %s27
      %s31 = sphi 0, %s28
      %s32 = sphi 0, %s29
      %s33 = sphi 0, %s30
      %s49 = sphi 0, %s51
      %s52 = sphi 0, %s49
      %s53 = sphi 0, %s52
      %s69 = sphi 0, %s53
      %s77 = sphi 0, %s79
      %s80 = sphi 0, %s77
      %s81 = sphi 0, %s80
      %s97 = sphi 0, %s81
      %s103 = sphi 0, %s105
      %s106 = sphi 0, %s103
      %s107 = sphi 0, %s106
      %s123 = sphi 0, %s107
      %s131 = sphi 0, %s133
      %s134 = sphi 0, %s131
      %s135 = sphi 0, %s134
      %s151 = sphi 0, %s135
    $region4: #{tpu_custom_call.1} parent=1 // loop_header_branch
      %21 = sbr.rel (%p19) target = $region8
    $region5: #{tpu_custom_call.1} parent=1 // loop_body
      %s23 = ssub.s32 %s18, 1
      %s24 = ssub.s32 %s18, 2
      %s34 = sadd.s32 1, %s27
      %p35 = scmp.ge.s32.totalorder %s34, 2
      %s36 = scalar_select %p35, 0, %s34
      %s37 = sadd.s32 1, %s26
      %s38 = scalar_select %p35, %s37, %s26
      %p39 = scmp.ge.s32.totalorder %s38, 3
      %s40 = scalar_select %p39, 0, %s38
      %s41 = sadd.s32 1, %s25
      %s42 = scalar_select %p39, %s41, %s25
      %p43 = scmp.ge.s32.totalorder %s42, 1
      %s44 = scalar_select %p43, 0, %s42
      %s45 = ssub.s32 %s25, %s44
      %s46 = ssub.s32 %s27, %s36
      %s47 = sor.u32 %s45, %s46
      %p48 = scmp.eq.s32.totalorder %s47, 0
      %s50 = sadd.s32 %s49, 1
      %s51 = scalar_select %p48, %s49, %s50
      %p54 = pneg %p48
      %p55 = scmp.eq.s32.totalorder %s18, 5
      %p56 = por %p54, %p55
      %p57 = scmp.ne.s32.totalorder %s49, %s52
      %p58 = scmp.eq.s32.totalorder %s18, 0
      %p59 = por %p57, %p58
      %p60 = scmp.ne.s32.totalorder %s49, %s52
      %p61 = scmp.eq.s32.totalorder %s23, 5
      %p62 = por %p60, %p61
      %p63 = scmp.ne.s32.totalorder %s52, %s53
      %p64 = scmp.eq.s32.totalorder %s23, 0
      %p65 = por %p63, %p64
      %p66 = scmp.ne.s32.totalorder %s52, %s53
      %p67 = scmp.eq.s32.totalorder %s24, 5
      %p68 = por %p66, %p67
      %p70 = scmp.ne.s32.totalorder %s53, %s69
      %p71 = scmp.eq.s32.totalorder %s24, 0
      %p72 = por %p70, %p71
      %s73 = ssub.s32 %s27, %s36
      %s74 = ssub.s32 %s26, %s40
      %s75 = sor.u32 %s73, %s74
      %p76 = scmp.eq.s32.totalorder %s75, 0
      %s78 = sadd.s32 %s77, 1
      %s79 = scalar_select %p76, %s77, %s78
      %p82 = pneg %p76
      %p83 = scmp.eq.s32.totalorder %s18, 5
      %p84 = por %p82, %p83
      %p85 = scmp.ne.s32.totalorder %s77, %s80
      %p86 = scmp.eq.s32.totalorder %s18, 0
      %p87 = por %p85, %p86
      %p88 = scmp.ne.s32.totalorder %s77, %s80
      %p89 = scmp.eq.s32.totalorder %s23, 5
      %p90 = por %p88, %p89
      %p91 = scmp.ne.s32.totalorder %s80, %s81
      %p92 = scmp.eq.s32.totalorder %s23, 0
      %p93 = por %p91, %p92
      %p94 = scmp.ne.s32.totalorder %s80, %s81
      %p95 = scmp.eq.s32.totalorder %s24, 5
      %p96 = por %p94, %p95
      %p98 = scmp.ne.s32.totalorder %s81, %s97
      %p99 = scmp.eq.s32.totalorder %s24, 0
      %p100 = por %p98, %p99
      %s101 = ssub.s32 %s26, %s40
      %p102 = scmp.eq.s32.totalorder %s101, 0
      %s104 = sadd.s32 %s103, 1
      %s105 = scalar_select %p102, %s103, %s104
      %p108 = pneg %p102
      %p109 = scmp.eq.s32.totalorder %s18, 5
      %p110 = por %p108, %p109
      %p111 = scmp.ne.s32.totalorder %s103, %s106
      %p112 = scmp.eq.s32.totalorder %s18, 0
      %p113 = por %p111, %p112
      %p114 = scmp.ne.s32.totalorder %s103, %s106
      %p115 = scmp.eq.s32.totalorder %s23, 5
      %p116 = por %p114, %p115
      %p117 = scmp.ne.s32.totalorder %s106, %s107
      %p118 = scmp.eq.s32.totalorder %s23, 0
      %p119 = por %p117, %p118
      %p120 = scmp.ne.s32.totalorder %s106, %s107
      %p121 = scmp.eq.s32.totalorder %s24, 5
      %p122 = por %p120, %p121
      %p124 = scmp.ne.s32.totalorder %s107, %s123
      %p125 = scmp.eq.s32.totalorder %s24, 0
      %p126 = por %p124, %p125
      %s127 = ssub.s32 %s25, %s44
      %s128 = ssub.s32 %s26, %s40
      %s129 = sor.u32 %s127, %s128
      %p130 = scmp.eq.s32.totalorder %s129, 0
      %s132 = sadd.s32 %s131, 1
      %s133 = scalar_select %p130, %s131, %s132
      %p136 = pneg %p130
      %p137 = scmp.eq.s32.totalorder %s18, 5
      %p138 = por %p136, %p137
      %p139 = scmp.ne.s32.totalorder %s131, %s134
      %p140 = scmp.eq.s32.totalorder %s18, 0
      %p141 = por %p139, %p140
      %p142 = scmp.ne.s32.totalorder %s131, %s134
      %p143 = scmp.eq.s32.totalorder %s23, 5
      %p144 = por %p142, %p143
      %p145 = scmp.ne.s32.totalorder %s134, %s135
      %p146 = scmp.eq.s32.totalorder %s23, 0
      %p147 = por %p145, %p146
      %p148 = scmp.ne.s32.totalorder %s134, %s135
      %p149 = scmp.eq.s32.totalorder %s24, 5
      %p150 = por %p148, %p149
      %p152 = scmp.ne.s32.totalorder %s135, %s151
      %p153 = scmp.eq.s32.totalorder %s24, 0
      %p154 = por %p152, %p153
      %p155 = scmp.le.s32.totalorder 1, %s18
      %p156 = scmp.lt.s32.totalorder %s18, 7
      %p157 = pnand %p155, %p156
      %p158 = pneg %p157
      // Predicated region
      $region9: #{tpu_custom_call.1} parent=5 // pred_check
        _
      $region10: #{tpu_custom_call.1} parent=5 // pred_check_branch
        %160 = sbr.rel (%p157) target = $region12
      $region11: #{tpu_custom_call.1} parent=5 // pred_region
        %s161 = ssub.s32 %s18, 1
      $region12: #{tpu_custom_call.1} parent=5 // pred_fallthru
        _
      %p162 = scmp.lt.s32.totalorder %s18, 6
      // Predicated region
      $region13: #{tpu_custom_call.1} parent=5 // pred_check
        %p163 = pneg %p162
      $region14: #{tpu_custom_call.1} parent=5 // pred_check_branch
        %165 = sbr.rel (%p163) target = $region16
      $region15: #{tpu_custom_call.1} parent=5 // pred_region
        // Predicated region
        $region17: #{tpu_custom_call.1} parent=15 // pred_check
          %p166 = pneg %p59
        $region18: #{tpu_custom_call.1} parent=15 // pred_check_branch
          %168 = sbr.rel (%p166) target = $region20
        $region19: #{tpu_custom_call.1} parent=15 // pred_region
          %s169 = sand.u32 %s49, 1
          %s170 = scalar_lea.sflag [#allocation4], %s169
          %s171 = sand.u32 %s49, 1
          %s172 = smul.addr %s171, 32
          %s173 = scalar_lea.vmem [#allocation3], %s172
          %s174 = smul.u32 4, %s25
          %s176 = ssub.s32 512, 512
          %177 = vsyncadd %s170, %s176
          %s178 = smul.addr %s174, 2
          %s179 = sadd.s32 %s27, %s178
          %s180 = smul.addr %s179, 128
          %s181 = scalar_lea.hbm %s0, %s180
          %s182 = sshll.u32 %s173, 4
          %s183 = int_to_ptr.vmem [resolvable:$true] %s182
          %188 = dma.hbm_to_vmem [thread:$0]  %s181, 512, %s183, %s170, 256, 128, 8
        $region20: #{tpu_custom_call.1} parent=15 // pred_fallthru
          _
        // Predicated region
        $region21: #{tpu_custom_call.1} parent=15 // pred_check
          %p189 = pneg %p87
        $region22: #{tpu_custom_call.1} parent=15 // pred_check_branch
          %191 = sbr.rel (%p189) target = $region24
        $region23: #{tpu_custom_call.1} parent=15 // pred_region
          %s192 = sand.u32 %s77, 1
          %s193 = scalar_lea.sflag [#allocation7], %s192
          %s194 = sand.u32 %s77, 1
          %s195 = smul.addr %s194, 256
          %s196 = scalar_lea.vmem [#allocation6], %s195
          %s197 = smul.u32 16, %s27
          %s198 = smul.u32 2, %s26
          %s200 = ssub.s32 4096, 4096
          %201 = vsyncadd %s193, %s200
          %s202 = smul.addr %s197, 6
          %s203 = sadd.s32 %s198, %s202
          %s204 = smul.addr %s203, 128
          %s205 = scalar_lea.hbm %s1, %s204
          %s206 = sshll.u32 %s196, 4
          %s207 = int_to_ptr.vmem [resolvable:$true] %s206
          %212 = dma.hbm_to_vmem [thread:$0]  %s205, 4096, %s207, %s193, 768, 256, 16
        $region24: #{tpu_custom_call.1} parent=15 // pred_fallthru
          _
        // Predicated region
        $region25: #{tpu_custom_call.1} parent=15 // pred_check
          %p213 = pneg %p113
        $region26: #{tpu_custom_call.1} parent=15 // pred_check_branch
          %215 = sbr.rel (%p213) target = $region28
        $region27: #{tpu_custom_call.1} parent=15 // pred_region
          %s216 = smul.u32 2, %s26
          %p217 = scmp.lt.s32.totalorder %s216, 5
          %s218 = scalar_select %p217, %s216, 5
          %s219 = scalar_lea.vmem %s2, %s218
          %s220 = smul.u32 2, %s26
        $region28: #{tpu_custom_call.1} parent=15 // pred_fallthru
          _
      $region16: #{tpu_custom_call.1} parent=5 // pred_fallthru
        _
      %p221 = scmp.le.s32.totalorder 1, %s18
      %p222 = scmp.lt.s32.totalorder %s18, 7
      %p223 = pnand %p221, %p222
      %p224 = pneg %p223
      // Predicated region
      $region29: #{tpu_custom_call.1} parent=5 // pred_check
        _
      $region30: #{tpu_custom_call.1} parent=5 // pred_check_branch
        %226 = sbr.rel (%p223) target = $region32
      $region31: #{tpu_custom_call.1} parent=5 // pred_region
        %s227 = ssub.s32 %s18, 1
        %s228 = sand.u32 %s52, 1
        %s229 = scalar_lea.sflag [#allocation4], %s228
        %s230 = sand.u32 %s52, 1
        %s231 = smul.addr %s230, 32
        %s232 = scalar_lea.vmem [#allocation3], %s231
        // Predicated region
        $region33: #{tpu_custom_call.1} parent=31 // pred_check
          %p233 = pneg %p65
        $region34: #{tpu_custom_call.1} parent=31 // pred_check_branch
          %235 = sbr.rel (%p233) target = $region36
        $region35: #{tpu_custom_call.1} parent=31 // pred_region
          %236 = dma.done %s229, 512
        $region36: #{tpu_custom_call.1} parent=31 // pred_fallthru
          _
        %s237 = sand.u32 %s80, 1
        %s238 = scalar_lea.sflag [#allocation7], %s237
        %s239 = sand.u32 %s80, 1
        %s240 = smul.addr %s239, 256
        %s241 = scalar_lea.vmem [#allocation6], %s240
        // Predicated region
        $region37: #{tpu_custom_call.1} parent=31 // pred_check
          %p242 = pneg %p93
        $region38: #{tpu_custom_call.1} parent=31 // pred_check_branch
          %244 = sbr.rel (%p242) target = $region40
        $region39: #{tpu_custom_call.1} parent=31 // pred_region
          %245 = dma.done %s238, 4096
        $region40: #{tpu_custom_call.1} parent=31 // pred_fallthru
          _
        %s246 = sand.u32 %s52, 1
        %s247 = scalar_lea.sflag [#allocation4], %s246
        %s248 = sand.u32 %s52, 1
        %s249 = smul.addr %s248, 32
        %s250 = scalar_lea.vmem [#allocation3], %s249
        %p251 = pneg %p65
        %p252 = pneg %p62
        %s253 = sand.u32 %s80, 1
        %s254 = scalar_lea.sflag [#allocation7], %s253
        %s255 = sand.u32 %s80, 1
        %s256 = smul.addr %s255, 256
        %s257 = scalar_lea.vmem [#allocation6], %s256
        %p258 = pneg %p93
        %p259 = pneg %p90
        %s260 = smul.u32 2, %s29
        %p261 = scmp.lt.s32.totalorder %s260, 5
        %s262 = scalar_select %p261, %s260, 5
        %s263 = scalar_lea.vmem %s2, %s262
        %p264 = pneg %p119
        %p265 = pneg %p116
        %p266 = pneg %p147
        %p267 = pneg %p144
        %s268 = sand.u32 %s134, 1
        %s269 = scalar_lea.sflag [#allocation5], %s268
        %s270 = sand.u32 %s134, 1
        %s271 = smul.addr %s270, 64
        %s272 = scalar_lea.vmem [#allocation8], %s271
        %s273 = smul.u32 4, %s28
        %s274 = smul.u32 16, %s30
        %s275 = smul.u32 2, %s29
        %s276 = smul.u32 2, %s29
        %p277 = scmp.lt.s32.totalorder %s276, 5
        %s278 = scalar_select %p277, %s276, 5
        %s279 = scalar_lea.vmem %s2, %s278
        %s280 = smul.u32 2, %s29
        %s281 = smul.u32 4, %s28
        %s282 = smul.u32 2, %s29
        %p283 = scmp.eq.s32.totalorder %s30, 0
        // Predicated region
        $region41: #{tpu_custom_call.1} parent=31 // pred_check
          %p284 = pneg %p283
        $region42: #{tpu_custom_call.1} parent=31 // pred_check_branch
          %286 = sbr.rel (%p284) target = $region44
        $region43: #{tpu_custom_call.1} parent=31 // pred_region
          %287 = vst [vmem:[#allocation2] sm:$0xff] 0.0
          %288 = vst [vmem:[#allocation2 + $0x8] sm:$0xff] 0.0
          %289 = vst [vmem:[#allocation2 + $0x10] sm:$0xff] 0.0
          %290 = vst [vmem:[#allocation2 + $0x18] sm:$0xff] 0.0
          %291 = vst [vmem:[#allocation2 + $0x20] sm:$0xff] 0.0
          %292 = vst [vmem:[#allocation2 + $0x28] sm:$0xff] 0.0
          %293 = vst [vmem:[#allocation2 + $0x30] sm:$0xff] 0.0
          %294 = vst [vmem:[#allocation2 + $0x38] sm:$0xff] 0.0
        $region44: #{tpu_custom_call.1} parent=31 // pred_fallthru
          _
        %v295 = vld [vmem:[#allocation2] sm:$0xff]
        %v296 = vld [vmem:[#allocation2 + $0x8] sm:$0xff]
        %v297 = vld [vmem:[#allocation2 + $0x10] sm:$0xff]
        %v298 = vld [vmem:[#allocation2 + $0x18] sm:$0xff]
        %v299 = vld [vmem:[#allocation2 + $0x20] sm:$0xff]
        %v300 = vld [vmem:[#allocation2 + $0x28] sm:$0xff]
        %v301 = vld [vmem:[#allocation2 + $0x30] sm:$0xff]
        %v302 = vld [vmem:[#allocation2 + $0x38] sm:$0xff]
        %v303 = vld [vmem:[%s232] sm:$0xff]
        %v304 = vld [vmem:[%s232 + $0x8] sm:$0xff]
        %v305 = vld [vmem:[%s232 + $0x10] sm:$0xff]
        %v306 = vld [vmem:[%s232 + $0x18] sm:$0xff]
        %v307 = vld [vmem:[%s241] sm:$0xff]
        %v308 = vld [vmem:[%s241 + $0x8] sm:$0xff]
        %v309 = vld [vmem:[%s241 + $0x10] sm:$0xff]
        %v310 = vld [vmem:[%s241 + $0x18] sm:$0xff]
        %v311 = vld [vmem:[%s241 + $0x20] sm:$0xff]
        %v312 = vld [vmem:[%s241 + $0x28] sm:$0xff]
        %v313 = vld [vmem:[%s241 + $0x30] sm:$0xff]
        %v314 = vld [vmem:[%s241 + $0x38] sm:$0xff]
        %v315 = vld [vmem:[%s241 + $0x40] sm:$0xff]
        %v316 = vld [vmem:[%s241 + $0x48] sm:$0xff]
        %v317 = vld [vmem:[%s241 + $0x50] sm:$0xff]
        %v318 = vld [vmem:[%s241 + $0x58] sm:$0xff]
        %v319 = vld [vmem:[%s241 + $0x60] sm:$0xff]
        %v320 = vld [vmem:[%s241 + $0x68] sm:$0xff]
        %v321 = vld [vmem:[%s241 + $0x70] sm:$0xff]
        %v322 = vld [vmem:[%s241 + $0x78] sm:$0xff]
        %v323 = vld [vmem:[%s241 + $0x80] sm:$0xff]
        %v324 = vld [vmem:[%s241 + $0x88] sm:$0xff]
        %v325 = vld [vmem:[%s241 + $0x90] sm:$0xff]
        %v326 = vld [vmem:[%s241 + $0x98] sm:$0xff]
        %v327 = vld [vmem:[%s241 + $0xa0] sm:$0xff]
        %v328 = vld [vmem:[%s241 + $0xa8] sm:$0xff]
        %v329 = vld [vmem:[%s241 + $0xb0] sm:$0xff]
        %v330 = vld [vmem:[%s241 + $0xb8] sm:$0xff]
        %v331 = vld [vmem:[%s241 + $0xc0] sm:$0xff]
        %v332 = vld [vmem:[%s241 + $0xc8] sm:$0xff]
        %v333 = vld [vmem:[%s241 + $0xd0] sm:$0xff]
        %v334 = vld [vmem:[%s241 + $0xd8] sm:$0xff]
        %v335 = vld [vmem:[%s241 + $0xe0] sm:$0xff]
        %v336 = vld [vmem:[%s241 + $0xe8] sm:$0xff]
        %v337 = vld [vmem:[%s241 + $0xf0] sm:$0xff]
        %v338 = vld [vmem:[%s241 + $0xf8] sm:$0xff]
        %339 = vmatprep.subr.mxu0 %v308
        %340 = vmatpush1.msra.mxu0 %v307
        %341 = vmatprep.subr.mxu0 %v310
        %342 = vmatpush1.msra.mxu0 %v309
        %343 = vmatprep.subr.mxu0 %v312
        %344 = vmatpush1.msra.mxu0 %v311
        %345 = vmatprep.subr.mxu0 %v314
        %346 = vmatpush1.msra.mxu0 %v313
        %347 = vmatprep.subr.mxu0 %v316
        %348 = vmatpush1.msra.mxu0 %v315
        %349 = vmatprep.subr.mxu0 %v318
        %350 = vmatpush1.msra.mxu0 %v317
        %351 = vmatprep.subr.mxu0 %v320
        %352 = vmatpush1.msra.mxu0 %v319
        %353 = vmatprep.subr.mxu0 %v322
        %354 = vmatpush1.msra.mxu0 %v321
        %355 = vmatprep.subr.mxu0 %v324
        %356 = vmatpush1.msra.mxu0 %v323
        %357 = vmatprep.subr.mxu0 %v326
        %358 = vmatpush1.msra.mxu0 %v325
        %359 = vmatprep.subr.mxu0 %v328
        %360 = vmatpush1.msra.mxu0 %v327
        %361 = vmatprep.subr.mxu0 %v330
        %362 = vmatpush1.msra.mxu0 %v329
        %363 = vmatprep.subr.mxu0 %v332
        %364 = vmatpush1.msra.mxu0 %v331
        %365 = vmatprep.subr.mxu0 %v334
        %366 = vmatpush1.msra.mxu0 %v333
        %367 = vmatprep.subr.mxu0 %v336
        %368 = vmatpush1.msra.mxu0 %v335
        %369 = vmatprep.subr.mxu0 %v338
        %370 = vmatpush1.msra.mxu0 %v337
        %371 = vmatprep.subr.mxu0 0.0
        %372 = vmatpush1.msra.mxu0 0.0
        %373 = vmatprep.subr.mxu0 0.0
        %374 = vmatpush1.msra.mxu0 0.0
        %375 = vmatprep.subr.mxu0 0.0
        %376 = vmatpush1.msra.mxu0 0.0
        %377 = vmatprep.subr.mxu0 0.0
        %378 = vmatpush1.msra.mxu0 0.0
        %379 = vmatprep.subr.mxu0 0.0
        %380 = vmatpush1.msra.mxu0 0.0
        %381 = vmatprep.subr.mxu0 0.0
        %382 = vmatpush1.msra.mxu0 0.0
        %383 = vmatprep.subr.mxu0 0.0
        %384 = vmatpush1.msra.mxu0 0.0
        %385 = vmatprep.subr.mxu0 0.0
        %386 = vmatpush1.msra.mxu0 0.0
        %387 = vmatprep.subr.mxu0 0.0
        %388 = vmatpush1.msra.mxu0 0.0
        %389 = vmatprep.subr.mxu0 0.0
        %390 = vmatpush1.msra.mxu0 0.0
        %391 = vmatprep.subr.mxu0 0.0
        %392 = vmatpush1.msra.mxu0 0.0
        %393 = vmatprep.subr.mxu0 0.0
        %394 = vmatpush1.msra.mxu0 0.0
        %395 = vmatprep.subr.mxu0 0.0
        %396 = vmatpush1.msra.mxu0 0.0
        %397 = vmatprep.subr.mxu0 0.0
        %398 = vmatpush1.msra.mxu0 0.0
        %399 = vmatprep.subr.mxu0 0.0
        %400 = vmatpush1.msra.mxu0 0.0
        %401 = vmatprep.subr.mxu0 0.0
        %402 = vmatpush1.msra.mxu0 0.0
        %403 = vmatprep.mubr.f32.mxu0 0.0
        %404 = vmatmul.mubr.f32.gmra.mrb[0].mxu0 %v303
        %v405 = vpop.f32.mrb[0].mxu0
        %v406 = vadd.f32 0.0, %v405
        %v407 = vpop.f32.mrb[0].mxu0
        %v408 = vadd.f32 0.0, %v407
        %409 = vmatprep.mubr.f32.mxu0 0.0
        %410 = vmatmul.mubr.f32.gmra.mrb[0].mxu0 %v304
        %v411 = vpop.f32.mrb[0].mxu0
        %v412 = vadd.f32 0.0, %v411
        %v413 = vpop.f32.mrb[0].mxu0
        %v414 = vadd.f32 0.0, %v413
        %415 = vmatprep.mubr.f32.mxu0 0.0
        %416 = vmatmul.mubr.f32.gmra.mrb[0].mxu0 %v305
        %v417 = vpop.f32.mrb[0].mxu0
        %v418 = vadd.f32 0.0, %v417
        %v419 = vpop.f32.mrb[0].mxu0
        %v420 = vadd.f32 0.0, %v419
        %421 = vmatprep.mubr.f32.mxu0 0.0
        %422 = vmatmul.mubr.f32.gmra.mrb[0].mxu0 %v306
        %v423 = vpop.f32.mrb[0].mxu0
        %v424 = vadd.f32 0.0, %v423
        %v425 = vpop.f32.mrb[0].mxu0
        %v426 = vadd.f32 0.0, %v425
        %427 = vdwg.mxu0
        %v428 = vadd.f32 %v295, %v406
        %v429 = vadd.f32 %v296, %v408
        %v430 = vadd.f32 %v297, %v412
        %v431 = vadd.f32 %v298, %v414
        %v432 = vadd.f32 %v299, %v418
        %v433 = vadd.f32 %v300, %v420
        %v434 = vadd.f32 %v301, %v424
        %v435 = vadd.f32 %v302, %v426
        %436 = vst [vmem:[#allocation2] sm:$0xff] %v428
        %437 = vst [vmem:[#allocation2 + $0x8] sm:$0xff] %v429
        %438 = vst [vmem:[#allocation2 + $0x10] sm:$0xff] %v430
        %439 = vst [vmem:[#allocation2 + $0x18] sm:$0xff] %v431
        %440 = vst [vmem:[#allocation2 + $0x20] sm:$0xff] %v432
        %441 = vst [vmem:[#allocation2 + $0x28] sm:$0xff] %v433
        %442 = vst [vmem:[#allocation2 + $0x30] sm:$0xff] %v434
        %443 = vst [vmem:[#allocation2 + $0x38] sm:$0xff] %v435
        %p444 = scmp.eq.s32.totalorder %s30, 1
        // Predicated region
        $region45: #{tpu_custom_call.1} parent=31 // pred_check
          %p445 = pneg %p444
        $region46: #{tpu_custom_call.1} parent=31 // pred_check_branch
          %447 = sbr.rel (%p445) target = $region48
        $region47: #{tpu_custom_call.1} parent=31 // pred_region
          %v448 = vld [vmem:[#allocation2] sm:$0xff]
          %v449 = vld [vmem:[#allocation2 + $0x8] sm:$0xff]
          %v450 = vld [vmem:[#allocation2 + $0x10] sm:$0xff]
          %v451 = vld [vmem:[#allocation2 + $0x18] sm:$0xff]
          %v452 = vld [vmem:[#allocation2 + $0x20] sm:$0xff]
          %v453 = vld [vmem:[#allocation2 + $0x28] sm:$0xff]
          %v454 = vld [vmem:[#allocation2 + $0x30] sm:$0xff]
          %v455 = vld [vmem:[#allocation2 + $0x38] sm:$0xff]
          %v456 = vld [vmem:[%s279] sm:$0x3]
          %v458 = vlaneseq
          %v459 = vshrl.u32 %v458, 7
          %v460 = vsub.s32 0, %v459
          %v461 = vrot.slane %v456, %v460
          %v462 = vlaneseq
          %v463 = vshrl.u32 %v462, 7
          %v464 = vsub.s32 1, %v463
          %v465 = vrot.slane %v456, %v464
          %v468 = vadd.f32 %v448, %v461
          %v469 = vadd.f32 %v449, %v465
          %v470 = vadd.f32 %v450, %v461
          %v471 = vadd.f32 %v451, %v465
          %v472 = vadd.f32 %v452, %v461
          %v473 = vadd.f32 %v453, %v465
          %v474 = vadd.f32 %v454, %v461
          %v475 = vadd.f32 %v455, %v465
          %476 = vst [vmem:[%s272] sm:$0xff] %v468
          %477 = vst [vmem:[%s272 + $0x8] sm:$0xff] %v469
          %478 = vst [vmem:[%s272 + $0x10] sm:$0xff] %v470
          %479 = vst [vmem:[%s272 + $0x18] sm:$0xff] %v471
          %480 = vst [vmem:[%s272 + $0x20] sm:$0xff] %v472
          %481 = vst [vmem:[%s272 + $0x28] sm:$0xff] %v473
          %482 = vst [vmem:[%s272 + $0x30] sm:$0xff] %v474
          %483 = vst [vmem:[%s272 + $0x38] sm:$0xff] %v475
        $region48: #{tpu_custom_call.1} parent=31 // pred_fallthru
          _
        %s484 = sand.u32 %s134, 1
        %s485 = scalar_lea.sflag [#allocation5], %s484
        %s486 = sand.u32 %s134, 1
        %s487 = smul.addr %s486, 64
        %s488 = scalar_lea.vmem [#allocation8], %s487
        // Predicated region
        $region49: #{tpu_custom_call.1} parent=31 // pred_check
          %p489 = pneg %p144
        $region50: #{tpu_custom_call.1} parent=31 // pred_check_branch
          %491 = sbr.rel (%p489) target = $region52
        $region51: #{tpu_custom_call.1} parent=31 // pred_region
          %s492 = smul.u32 4, %s28
          %s493 = smul.u32 2, %s29
          %s495 = ssub.s32 1024, 1024
          %496 = vsyncadd %s485, %s495
          %s497 = smul.addr %s492, 6
          %s498 = sadd.s32 %s493, %s497
          %s499 = smul.addr %s498, 128
          %s500 = scalar_lea.hbm %s3, %s499
          %s501 = sshll.u32 %s488, 4
          %s502 = int_to_ptr.vmem [resolvable:$true] %s501
          %507 = dma.vmem_to_hbm [thread:$0]  %s502, 1024, %s500, %s485, 256, 768, 16
        $region52: #{tpu_custom_call.1} parent=31 // pred_fallthru
          _
      $region32: #{tpu_custom_call.1} parent=5 // pred_fallthru
        _
      %p508 = scmp.le.s32.totalorder 2, %s18
      // Predicated region
      $region53: #{tpu_custom_call.1} parent=5 // pred_check
        %p509 = pneg %p508
      $region54: #{tpu_custom_call.1} parent=5 // pred_check_branch
        %511 = sbr.rel (%p509) target = $region56
      $region55: #{tpu_custom_call.1} parent=5 // pred_region
        %s512 = ssub.s32 %s18, 2
        // Predicated region
        $region57: #{tpu_custom_call.1} parent=55 // pred_check
          %p513 = pneg %p150
        $region58: #{tpu_custom_call.1} parent=55 // pred_check_branch
          %515 = sbr.rel (%p513) target = $region60
        $region59: #{tpu_custom_call.1} parent=55 // pred_region
          %s516 = sand.u32 %s135, 1
          %s517 = scalar_lea.sflag [#allocation5], %s516
          %s518 = sand.u32 %s135, 1
          %s519 = smul.addr %s518, 64
          %s520 = scalar_lea.vmem [#allocation8], %s519
          %521 = dma.done %s517, 1024
        $region60: #{tpu_custom_call.1} parent=55 // pred_fallthru
          _
      $region56: #{tpu_custom_call.1} parent=5 // pred_fallthru
        _
    $region6: #{tpu_custom_call.1} parent=1 // loop_footer
      %s22 = sadd.s32 1, %s18
    $region7: #{tpu_custom_call.1} parent=1 // loop_footer_branch
      %17 = sbr.rel target = $region3
    $region8: #{tpu_custom_call.1} parent=1 // loop_exit
      _
    %522 = vsyncpa [#allocation4], 1
    %s523 = scalar_lea.sflag [#allocation4], 1
    %524 = vsyncpa %s523, 1
    %525 = vsyncpa [#allocation7], 1
    %s526 = scalar_lea.sflag [#allocation7], 1
    %527 = vsyncpa %s526, 1
    %528 = vsyncpa [#allocation5], 1
    %s529 = scalar_lea.sflag [#allocation5], 1
    %530 = vsyncpa %s529, 1

</llo_original>
